<compile_context>
chip_gen: v7x
topology: tpu7x:2x2x1
jax: 0.10.0
libtpu: 0.0.40
codegen_flags: <defaults>
</compile_context>

<pallas_src>
import jax
import jax.numpy as jnp
from jax.experimental import pallas as pl
from jax.experimental.pallas import tpu as pltpu


# ------------------------------------------------------------------ utilities

def _round_up(x: int, m: int) -> int:
    return ((x + m - 1) // m) * m


def _pad2(a: jnp.ndarray, rows: int, cols: int) -> jnp.ndarray:
    return jnp.pad(a, ((0, rows - a.shape[0]), (0, cols - a.shape[1])))


def _vmem_limit_bytes() -> int:
    """Per-generation VMEM budget: ~3/4 of physical, capped at 100 MiB."""
    try:
        cap = int(getattr(pltpu.get_tpu_info(), "vmem_capacity_bytes", 0))
    except Exception:
        cap = 0
    if cap <= 0:
        return 48 << 20          # safe on v5e/v6e (128 MiB) and v7x (64 MiB)
    return int(min(cap * 3 // 4, 100 << 20))


def _pick_tiles(n: int) -> tuple[int, int]:
    """(TM, TK) for the (row-tile, source-tile) grid.

    TK (lane axis of the streamed A_hat tile) is made large to amortize the
    per-grid-step overhead and lengthen contiguous DMA bursts; TM is kept
    small enough that there are >=2 row tiles (v7x has 2 TCs on the
    'parallel' row axis) whenever the graph allows it.
    """
    tk = min(2048, _round_up(max(n, 1), 128))
    tm = min(256, _round_up(max((n + 1) // 2, 8), 8))
    return tm, tk


# ------------------------------------------------------------------ kernels

def _gcn_layer_kernel(adj_ref, x_ref, w_ref, b_ref, out_ref, acc_ref):
    """One GCNConv:  relu((A_hat @ X) @ W + b)  for one target row tile.

    Grid = (row_tiles, src_tiles); src axis is the reduction axis.
    adj_ref: (TM, TK) bf16 A_hat tile, x_ref: (TK, Fin) bf16 source tile,
    w_ref: (Fin, Fout) bf16, b_ref: (1, Fout) f32,
    out_ref: (TM, Fout) bf16, acc_ref: (TM, Fin) f32 scratch.
    """
    k = pl.program_id(1)

    @pl.when(k == 0)
    def _init():
        acc_ref[...] = jnp.zeros_like(acc_ref)

    acc_ref[...] += jnp.dot(adj_ref[...], x_ref[...],
                            preferred_element_type=jnp.float32)

    @pl.when(k == pl.num_programs(1) - 1)
    def _finalize():
        h = jnp.dot(acc_ref[...].astype(jnp.bfloat16), w_ref[...],
                    preferred_element_type=jnp.float32)
        h = jnp.maximum(h + b_ref[...], 0.0)
        out_ref[...] = h.astype(out_ref.dtype)


def _gcn_layer_residual_kernel(adj_ref, h_ref, x_ref, w2_ref, b2_ref,
                               wp_ref, bp_ref, out_ref, acc_ref, res_ref):
    """Second GCNConv fused with the input_proj residual:
       relu((A_hat @ H1) @ W2 + b2) + (X @ Wp + bp)   for one row tile.

    The residual is computed at k==0 (overlaps with subsequent adj DMAs) into
    res_ref and only added in the finalize.
    """
    k = pl.program_id(1)

    @pl.when(k == 0)
    def _init():
        acc_ref[...] = jnp.zeros_like(acc_ref)
        res_ref[...] = jnp.dot(x_ref[...], wp_ref[...],
                               preferred_element_type=jnp.float32) + bp_ref[...]

    acc_ref[...] += jnp.dot(adj_ref[...], h_ref[...],
                            preferred_element_type=jnp.float32)

    @pl.when(k == pl.num_programs(1) - 1)
    def _finalize():
        h2 = jnp.dot(acc_ref[...].astype(jnp.bfloat16), w2_ref[...],
                     preferred_element_type=jnp.float32)
        h2 = jnp.maximum(h2 + b2_ref[...], 0.0)
        out_ref[...] = h2 + res_ref[...]


# ------------------------------------------------------------------ graph prep

def build_normalized_adjacency(edge_index: jnp.ndarray, num_nodes: int) -> jnp.ndarray:
    """Dense D^{-1/2}(A + I)D^{-1/2}; A_hat[target, source].

    Matches torch_geometric gcn_norm: existing self-loops are dropped before
    adding fresh unit self-loops (add_remaining_self_loops); duplicate edges
    accumulate weight (scatter_add), degrees computed on the target index.
    """
    src = edge_index[0]
    dst = edge_index[1]
    w = jnp.where(src != dst, 1.0, 0.0).astype(jnp.float32)
    adj = jnp.zeros((num_nodes, num_nodes), dtype=jnp.float32)
    adj = adj.at[dst, src].add(w)
    adj = adj + jnp.eye(num_nodes, dtype=jnp.float32)          # fresh self loops
    deg = jnp.sum(adj, axis=1)
    dinv = jnp.where(deg > 0, jax.lax.rsqrt(deg), 0.0)
    return adj * dinv[:, None] * dinv[None, :]


# ------------------------------------------------------------------ forward

def tabular_gnn(x, edge_index, batch, params):
    # `batch` is unused in the reference forward (no pooling) — signature parity.
    del batch
    n, in_dim = x.shape
    hidden_dim = params["w1"].shape[1]
    out_dim = params["w2"].shape[1]

    # Lane-dense (128-multiple) feature dims.
    in_p = _round_up(in_dim, 128)
    h_p = _round_up(hidden_dim, 128)
    o_p = _round_up(out_dim, 128)

    # Independent row/col padding: rows to TM, cols (sources) to TK.
    tm, tk = _pick_tiles(n)
    n_row_pad = _round_up(n, tm)
    n_src_pad = _round_up(n, tk)

    adj = build_normalized_adjacency(edge_index, n)
    adj_p = jnp.pad(adj, ((0, n_row_pad - n), (0, n_src_pad - n))).astype(jnp.bfloat16)
    x_src = jnp.pad(x, ((0, n_src_pad - n), (0, in_p - in_dim))).astype(jnp.bfloat16)
    x_row = jnp.pad(x, ((0, n_row_pad - n), (0, in_p - in_dim))).astype(jnp.bfloat16)

    # bf16 weights (MXU-native); f32 biases added post-dot.
    w1 = _pad2(params["w1"], in_p, h_p).astype(jnp.bfloat16)
    b1 = _pad2(params["b1"], 1, h_p).astype(jnp.float32)
    w2 = _pad2(params["w2"], h_p, o_p).astype(jnp.bfloat16)
    b2 = _pad2(params["b2"], 1, o_p).astype(jnp.float32)
    wp = _pad2(params["wp"], in_p, o_p).astype(jnp.bfloat16)
    bp = _pad2(params["bp"], 1, o_p).astype(jnp.float32)

    grid = (n_row_pad // tm, n_src_pad // tk)
    cparams = pltpu.CompilerParams(
        dimension_semantics=("parallel", "arbitrary"),
        vmem_limit_bytes=_vmem_limit_bytes(),
    )

    # Layer 1: H1 = relu((A_hat @ X) @ W1 + b1)   -> bf16 for the next stream.
    h1 = pl.pallas_call(
        _gcn_layer_kernel,
        out_shape=jax.ShapeDtypeStruct((n_row_pad, h_p), jnp.bfloat16),
        grid=grid,
        in_specs=[
            pl.BlockSpec((tm, tk), lambda i, k: (i, k)),     # A_hat tile (streamed)
            pl.BlockSpec((tk, in_p), lambda i, k: (k, 0)),   # X source tile (pipelined)
            pl.BlockSpec((in_p, h_p), lambda i, k: (0, 0)),  # W1
            pl.BlockSpec((1, h_p), lambda i, k: (0, 0)),     # b1
        ],
        out_specs=pl.BlockSpec((tm, h_p), lambda i, k: (i, 0)),
        scratch_shapes=[pltpu.VMEM((tm, in_p), jnp.float32)],
        compiler_params=cparams,
    )(adj_p, x_src, w1, b1)

    # Re-shape H1 to the source padding (padded rows multiply zero adj columns).
    if n_row_pad >= n_src_pad:
        h1_src = h1[:n_src_pad]
    else:
        h1_src = jnp.pad(h1, ((0, n_src_pad - n_row_pad), (0, 0)))

    # Layer 2 + residual: relu((A_hat @ H1) @ W2 + b2) + (X @ Wp + bp)
    out_p = pl.pallas_call(
        _gcn_layer_residual_kernel,
        out_shape=jax.ShapeDtypeStruct((n_row_pad, o_p), jnp.float32),
        grid=grid,
        in_specs=[
            pl.BlockSpec((tm, tk), lambda i, k: (i, k)),     # A_hat tile (streamed)
            pl.BlockSpec((tk, h_p), lambda i, k: (k, 0)),    # H1 source tile (pipelined)
            pl.BlockSpec((tm, in_p), lambda i, k: (i, 0)),   # X row tile (residual)
            pl.BlockSpec((h_p, o_p), lambda i, k: (0, 0)),   # W2
            pl.BlockSpec((1, o_p), lambda i, k: (0, 0)),     # b2
            pl.BlockSpec((in_p, o_p), lambda i, k: (0, 0)),  # Wp
            pl.BlockSpec((1, o_p), lambda i, k: (0, 0)),     # bp
        ],
        out_specs=pl.BlockSpec((tm, o_p), lambda i, k: (i, 0)),
        scratch_shapes=[pltpu.VMEM((tm, h_p), jnp.float32),
                        pltpu.VMEM((tm, o_p), jnp.float32)],
        compiler_params=cparams,
    )(adj_p, h1_src, x_row, w2, b2, wp, bp)

    return out_p[:n, :out_dim]


# ------------------------------------------------------------------ params

def init_params(key, in_dim, hidden_dim, out_dim):
    k1, k2, k3 = jax.random.split(key, 3)
    scale = lambda fan_in: 1.0 / jnp.sqrt(jnp.float32(fan_in))
    return {
        "w1": jax.random.normal(k1, (in_dim, hidden_dim), jnp.float32) * scale(in_dim),
        "b1": jnp.zeros((1, hidden_dim), jnp.float32),
        "w2": jax.random.normal(k2, (hidden_dim, out_dim), jnp.float32) * scale(hidden_dim),
        "b2": jnp.zeros((1, out_dim), jnp.float32),
        "wp": jax.random.normal(k3, (in_dim, out_dim), jnp.float32) * scale(in_dim),
        "bp": jnp.full((1, out_dim), 0.01, jnp.float32),
    }


# ------------------------------------------------------------------ main

if __name__ == "__main__":
    # Small but big enough to exercise a multi-tile row grid (2 row tiles).
    N, IN_DIM, HIDDEN_DIM, OUT_DIM, E = 256, 16, 32, 16, 1024

    key = jax.random.PRNGKey(0)
    kx, ke, kp = jax.random.split(key, 3)

    x = jax.random.normal(kx, (N, IN_DIM), jnp.float32)
    edge_index = jax.random.randint(ke, (2, E), 0, N, dtype=jnp.int32)
    batch = jnp.zeros((N,), dtype=jnp.int32)

    params = init_params(kp, IN_DIM, HIDDEN_DIM, OUT_DIM)

    out = tabular_gnn(x, edge_index, batch, params)
    jax.block_until_ready(out)
    assert out.shape == (N, OUT_DIM)

    adj = build_normalized_adjacency(edge_index, N)

    # Matched reference (same bf16 casts / f32 accumulation as the kernel).
    adj_b = adj.astype(jnp.bfloat16)
    x_b = x.astype(jnp.bfloat16)
    w1_b = params["w1"].astype(jnp.bfloat16)
    w2_b = params["w2"].astype(jnp.bfloat16)
    wp_b = params["wp"].astype(jnp.bfloat16)
    ax = jnp.dot(adj_b, x_b, preferred_element_type=jnp.float32)
    h1_f = jnp.maximum(
        jnp.dot(ax.astype(jnp.bfloat16), w1_b, preferred_element_type=jnp.float32)
        + params["b1"], 0.0)
    h1_ref = h1_f.astype(jnp.bfloat16)
    ah = jnp.dot(adj_b, h1_ref, preferred_element_type=jnp.float32)
    h2_ref = jnp.maximum(
        jnp.dot(ah.astype(jnp.bfloat16), w2_b, preferred_element_type=jnp.float32)
        + params["b2"], 0.0)
    res_ref = jnp.dot(x_b, wp_b, preferred_element_type=jnp.float32) + params["bp"]
    ref_matched = h2_ref + res_ref
    assert jnp.allclose(out, ref_matched, atol=1e-2, rtol=1e-2)

    # Full-f32 reference (module semantics), loose tolerance for bf16 streams.
    h1f = jnp.maximum(adj @ (x @ params["w1"]) + params["b1"], 0.0)
    h2f = jnp.maximum(adj @ (h1f @ params["w2"]) + params["b2"], 0.0)
    ref_f32 = h2f + (x @ params["wp"] + params["bp"])
    assert jnp.allclose(out, ref_f32, atol=6e-2, rtol=6e-2)

    print("KERNEL_OK")
</pallas_src>

<mosaic_0001>
module attributes {stable_mosaic.version = 11 : i64} {
  func.func @_gcn_layer_kernel(%arg0: i32, %arg1: i32, %arg2: memref<128x256xbf16, #tpu.memory_space<vmem>>, %arg3: memref<256x128xbf16, #tpu.memory_space<vmem>>, %arg4: memref<128x128xbf16, #tpu.memory_space<vmem>>, %arg5: memref<1x128xf32, #tpu.memory_space<vmem>>, %arg6: memref<128x128xbf16, #tpu.memory_space<vmem>>, %arg7: memref<128x128xf32, #tpu.memory_space<vmem>>) attributes {dimension_semantics = [#tpu.dimension_semantics<parallel>, #tpu.dimension_semantics<arbitrary>], iteration_bounds = array<i64: 2, 1>, scalar_prefetch = 0 : i64, scratch_operands = 1 : i64, tpu.core_type = #tpu.core_type<tc>, window_params = [{transform_indices = @transform_0, window_bounds = array<i64: 128, 256>}, {transform_indices = @transform_1, window_bounds = array<i64: 256, 128>}, {pipeline_mode = #tpu.pipeline_mode<synchronous>, transform_indices = @transform_2, window_bounds = array<i64: 128, 128>}, {pipeline_mode = #tpu.pipeline_mode<synchronous>, transform_indices = @transform_3, window_bounds = array<i64: 1, 128>}, {transform_indices = @transform_4, window_bounds = array<i64: 128, 128>}]} {
    %c0_i32 = arith.constant 0 : i32
    %0 = arith.cmpi eq, %arg1, %c0_i32 : i32
    %1 = arith.extui %0 : i1 to i32
    %c0_i32_0 = arith.constant 0 : i32
    %2 = arith.cmpi ne, %1, %c0_i32_0 : i32
    scf.if %2 {
      %cst_10 = arith.constant 0.000000e+00 : f32
      %12 = vector.broadcast %cst_10 : f32 to vector<128x128xf32>
      %c0_11 = arith.constant 0 : index
      %c0_12 = arith.constant 0 : index
      %13 = vector.load %arg7[%c0_11, %c0_12] : memref<128x128xf32, #tpu.memory_space<vmem>>, vector<128x128xf32>
      tpu.vector_store %arg7[%c0_11, %c0_12], %12 {strides = array<i32>} : memref<128x128xf32, #tpu.memory_space<vmem>>, vector<128x128xf32>,
    } else {
    }
    %c0 = arith.constant 0 : index
    %c0_1 = arith.constant 0 : index
    %3 = vector.load %arg7[%c0, %c0_1] : memref<128x128xf32, #tpu.memory_space<vmem>>, vector<128x128xf32>
    %c0_2 = arith.constant 0 : index
    %c0_3 = arith.constant 0 : index
    %4 = vector.load %arg2[%c0_2, %c0_3] : memref<128x256xbf16, #tpu.memory_space<vmem>>, vector<128x256xbf16>
    %c0_4 = arith.constant 0 : index
    %c0_5 = arith.constant 0 : index
    %5 = vector.load %arg3[%c0_4, %c0_5] : memref<256x128xbf16, #tpu.memory_space<vmem>>, vector<256x128xbf16>
    %cst = arith.constant dense<0.000000e+00> : vector<128x128xf32>
    %6 = tpu.matmul %4, %5, %cst {dimension_numbers = #tpu.dot_dimension_numbers<[1], [0], [0], [1], [0, 0, 1, 1], [], []>} : vector<128x256xbf16>, vector<256x128xbf16>, vector<128x128xf32> -> vector<128x128xf32>
    %7 = arith.addf %3, %6 : vector<128x128xf32>
    %c0_6 = arith.constant 0 : index
    %c0_7 = arith.constant 0 : index
    %8 = vector.load %arg7[%c0_6, %c0_7] : memref<128x128xf32, #tpu.memory_space<vmem>>, vector<128x128xf32>
    tpu.vector_store %arg7[%c0_6, %c0_7], %7 {strides = array<i32>} : memref<128x128xf32, #tpu.memory_space<vmem>>, vector<128x128xf32>,
    %c0_i32_8 = arith.constant 0 : i32
    %9 = arith.cmpi eq, %arg1, %c0_i32_8 : i32
    %10 = arith.extui %9 : i1 to i32
    %c0_i32_9 = arith.constant 0 : i32
    %11 = arith.cmpi ne, %10, %c0_i32_9 : i32
    scf.if %11 {
      %c0_10 = arith.constant 0 : index
      %c0_11 = arith.constant 0 : index
      %12 = vector.load %arg7[%c0_10, %c0_11] : memref<128x128xf32, #tpu.memory_space<vmem>>, vector<128x128xf32>
      %13 = arith.truncf %12 : vector<128x128xf32> to vector<128x128xbf16>
      %c0_12 = arith.constant 0 : index
      %c0_13 = arith.constant 0 : index
      %14 = vector.load %arg4[%c0_12, %c0_13] : memref<128x128xbf16, #tpu.memory_space<vmem>>, vector<128x128xbf16>
      %cst_14 = arith.constant dense<0.000000e+00> : vector<128x128xf32>
      %15 = tpu.matmul %13, %14, %cst_14 {dimension_numbers = #tpu.dot_dimension_numbers<[1], [0], [0], [1], [0, 0, 1, 1], [], []>} : vector<128x128xbf16>, vector<128x128xbf16>, vector<128x128xf32> -> vector<128x128xf32>
      %c0_15 = arith.constant 0 : index
      %c0_16 = arith.constant 0 : index
      %16 = vector.load %arg5[%c0_15, %c0_16] : memref<1x128xf32, #tpu.memory_space<vmem>>, vector<1x128xf32>
      %17 = vector.broadcast %16 : vector<1x128xf32> to vector<128x128xf32>
      %18 = arith.addf %15, %17 : vector<128x128xf32>
      %cst_17 = arith.constant 0.000000e+00 : f32
      %19 = vector.broadcast %cst_17 : f32 to vector<128x128xf32>
      %20 = arith.maximumf %18, %19 : vector<128x128xf32>
      %21 = arith.truncf %20 : vector<128x128xf32> to vector<128x128xbf16>
      %c0_18 = arith.constant 0 : index
      %c0_19 = arith.constant 0 : index
      %22 = vector.load %arg6[%c0_18, %c0_19] : memref<128x128xbf16, #tpu.memory_space<vmem>>, vector<128x128xbf16>
      tpu.vector_store %arg6[%c0_18, %c0_19], %21 {strides = array<i32>} : memref<128x128xbf16, #tpu.memory_space<vmem>>, vector<128x128xbf16>,
    } else {
    }
    return
  }
  func.func @transform_0(%arg0: i32, %arg1: i32) -> (i32, i32) {
    %c0_i32 = arith.constant 0 : i32
    return %arg0, %arg1 : i32, i32
  }
  func.func @transform_1(%arg0: i32, %arg1: i32) -> (i32, i32) {
    %c0_i32 = arith.constant 0 : i32
    %c0_i32_0 = arith.constant 0 : i32
    return %arg1, %c0_i32 : i32, i32
  }
  func.func @transform_2(%arg0: i32, %arg1: i32) -> (i32, i32) {
    %c0_i32 = arith.constant 0 : i32
    %c0_i32_0 = arith.constant 0 : i32
    %c0_i32_1 = arith.constant 0 : i32
    return %c0_i32, %c0_i32_0 : i32, i32
  }
  func.func @transform_3(%arg0: i32, %arg1: i32) -> (i32, i32) {
    %c0_i32 = arith.constant 0 : i32
    %c0_i32_0 = arith.constant 0 : i32
    %c0_i32_1 = arith.constant 0 : i32
    return %c0_i32, %c0_i32_0 : i32, i32
  }
  func.func @transform_4(%arg0: i32, %arg1: i32) -> (i32, i32) {
    %c0_i32 = arith.constant 0 : i32
    %c0_i32_0 = arith.constant 0 : i32
    return %arg0, %c0_i32 : i32, i32
  }
}

</mosaic_0001>

<llo_original>
// kernel: tpu_custom_call.1
$region0: #{tpu_custom_call.1}
  #allocation0 [shape = 'u32[]', space=smem, size = 0x4, offset = 0x4, fixed_abs, tag = 'smem constant byte address 0x4 - core index']
  #allocation1 [shape = 'u32[144,128]{1,0:T(1,128)}', space=vmem, size = 0x12000, scoped, tag = 'internal scratch']
  #allocation2 [shape = 'f32[128,128]{1,0:T(8,128)}', space=vmem, size = 0x10000, scoped, tag = 'scratch operand']
  %s0 = inlined_call_operand.hbm [shape: bf16[256,256], index: 0, kind: input, shape index: {}]
  %s1 = inlined_call_operand.hbm [shape: bf16[256,128], index: 1, kind: input, shape index: {}]
  %s2 = inlined_call_operand.hbm [shape: bf16[128,128], index: 2, kind: input, shape index: {}]
  %s3 = inlined_call_operand.vmem [shape: f32[1,128], index: 3, kind: input, shape index: {}]
  %s4 = inlined_call_operand.hbm [shape: bf16[256,128], index: 4, kind: output, shape index: {}]
  %s5 = sld [smem:[#allocation0]]
  $region69: #{tpu_custom_call.1} parent=0
    _
  %s7 = ssub.s32 1, %s5
  %s8 = scalar_select 0, %s7, %s5
  $region1: #{tpu_custom_call.1} parent=0
    #allocation3 [shape = 'u8[131072]{0}', space=vmem, size = 0x20000, scoped, tag = 'input window, operand 0']
    #allocation4 [shape = 's32[2]{0}', space=sflag, size = 0x8, scoped, tag = 'scoped memory for tpu_custom_call.1']
    #allocation5 [shape = 's32[2]{0}', space=sflag, size = 0x8, scoped, tag = 'scoped memory for tpu_custom_call.1']
    #allocation6 [shape = 'u8[65536]{0}', space=vmem, size = 0x10000, scoped, tag = 'input window, operand 1, single buffered']
    #allocation7 [shape = 's32[1]{0}', space=sflag, size = 0x4, scoped, tag = 'scoped memory for tpu_custom_call.1']
    #allocation8 [shape = 'u8[32768]{0}', space=vmem, size = 0x8000, scoped, tag = 'input window, operand 2, single buffered']
    #allocation9 [shape = 'u8[65536]{0}', space=vmem, size = 0x10000, scoped, tag = 'output window, operand 0']
    %9 = vsyncpa [#allocation4], 0
    %s10 = scalar_lea.sflag [#allocation4], 1
    %11 = vsyncpa %s10, 0
    %12 = vsyncpa [#allocation7], 0
    %13 = vsyncpa [#allocation5], 0
    %s14 = scalar_lea.sflag [#allocation5], 1
    %15 = vsyncpa %s14, 0
    loop: start=0, step=1, limit=4
    $region2: #{tpu_custom_call.1} parent=1 // loop_pre_header
      _
    $region3: #{tpu_custom_call.1} parent=1 // loop_header
      %s17 = sphi 0, %s21
      %p18 = scmp.ge.s32.totalorder %s17, 4
      %s24 = sphi 0, %s36
      %s25 = sphi 0, %s32
      %s26 = sphi 0, %s24
      %s27 = sphi 0, %s25
      %s28 = sphi 0, %s26
      %s29 = sphi 0, %s27
      %s41 = sphi 0, %s43
      %s44 = sphi 0, %s41
      %s45 = sphi 0, %s44
      %s61 = sphi 0, %s45
      %s67 = sphi 0, %s69
      %s70 = sphi 0, %s67
      %s71 = sphi 0, %s70
      %s87 = sphi 0, %s71
      %s91 = sphi 0, %s91
      %s93 = sphi 0, %s91
      %s94 = sphi 0, %s93
      %s108 = sphi 0, %s94
      %s112 = sphi 0, %s112
      %s114 = sphi 0, %s112
      %s115 = sphi 0, %s114
      %s129 = sphi 0, %s115
      %s135 = sphi 0, %s137
      %s138 = sphi 0, %s135
      %s139 = sphi 0, %s138
      %s155 = sphi 0, %s139
    $region4: #{tpu_custom_call.1} parent=1 // loop_header_branch
      %20 = sbr.rel (%p18) target = $region8
    $region5: #{tpu_custom_call.1} parent=1 // loop_body
      %s22 = ssub.s32 %s17, 1
      %s23 = ssub.s32 %s17, 2
      %s30 = sadd.s32 1, %s25
      %p31 = scmp.ge.s32.totalorder %s30, 1
      %s32 = scalar_select %p31, 0, %s30
      %s33 = sadd.s32 1, %s24
      %s34 = scalar_select %p31, %s33, %s24
      %p35 = scmp.ge.s32.totalorder %s34, 2
      %s36 = scalar_select %p35, 0, %s34
      %s37 = ssub.s32 %s24, %s36
      %s38 = ssub.s32 %s25, %s32
      %s39 = sor.u32 %s37, %s38
      %p40 = scmp.eq.s32.totalorder %s39, 0
      %s42 = sadd.s32 %s41, 1
      %s43 = scalar_select %p40, %s41, %s42
      %p46 = pneg %p40
      %p47 = scmp.eq.s32.totalorder %s17, 1
      %p48 = por %p46, %p47
      %p49 = scmp.ne.s32.totalorder %s41, %s44
      %p50 = scmp.eq.s32.totalorder %s17, 0
      %p51 = por %p49, %p50
      %p52 = scmp.ne.s32.totalorder %s41, %s44
      %p53 = scmp.eq.s32.totalorder %s22, 1
      %p54 = por %p52, %p53
      %p55 = scmp.ne.s32.totalorder %s44, %s45
      %p56 = scmp.eq.s32.totalorder %s22, 0
      %p57 = por %p55, %p56
      %p58 = scmp.ne.s32.totalorder %s44, %s45
      %p59 = scmp.eq.s32.totalorder %s23, 1
      %p60 = por %p58, %p59
      %p62 = scmp.ne.s32.totalorder %s45, %s61
      %p63 = scmp.eq.s32.totalorder %s23, 0
      %p64 = por %p62, %p63
      %s65 = ssub.s32 %s25, %s32
      %p66 = scmp.eq.s32.totalorder %s65, 0
      %s68 = sadd.s32 %s67, 1
      %s69 = scalar_select %p66, %s67, %s68
      %p72 = pneg %p66
      %p73 = scmp.eq.s32.totalorder %s17, 1
      %p74 = por %p72, %p73
      %p75 = scmp.ne.s32.totalorder %s67, %s70
      %p76 = scmp.eq.s32.totalorder %s17, 0
      %p77 = por %p75, %p76
      %p78 = scmp.ne.s32.totalorder %s67, %s70
      %p79 = scmp.eq.s32.totalorder %s22, 1
      %p80 = por %p78, %p79
      %p81 = scmp.ne.s32.totalorder %s70, %s71
      %p82 = scmp.eq.s32.totalorder %s22, 0
      %p83 = por %p81, %p82
      %p84 = scmp.ne.s32.totalorder %s70, %s71
      %p85 = scmp.eq.s32.totalorder %s23, 1
      %p86 = por %p84, %p85
      %p88 = scmp.ne.s32.totalorder %s71, %s87
      %p89 = scmp.eq.s32.totalorder %s23, 0
      %p90 = por %p88, %p89
      %s92 = sadd.s32 %s91, 1
      %p95 = scmp.eq.s32.totalorder %s17, 1
      %p96 = scmp.ne.s32.totalorder %s91, %s93
      %p97 = scmp.eq.s32.totalorder %s17, 0
      %p98 = por %p96, %p97
      %p99 = scmp.ne.s32.totalorder %s91, %s93
      %p100 = scmp.eq.s32.totalorder %s22, 1
      %p101 = por %p99, %p100
      %p102 = scmp.ne.s32.totalorder %s93, %s94
      %p103 = scmp.eq.s32.totalorder %s22, 0
      %p104 = por %p102, %p103
      %p105 = scmp.ne.s32.totalorder %s93, %s94
      %p106 = scmp.eq.s32.totalorder %s23, 1
      %p107 = por %p105, %p106
      %p109 = scmp.ne.s32.totalorder %s94, %s108
      %p110 = scmp.eq.s32.totalorder %s23, 0
      %p111 = por %p109, %p110
      %s113 = sadd.s32 %s112, 1
      %p116 = scmp.eq.s32.totalorder %s17, 1
      %p117 = scmp.ne.s32.totalorder %s112, %s114
      %p118 = scmp.eq.s32.totalorder %s17, 0
      %p119 = por %p117, %p118
      %p120 = scmp.ne.s32.totalorder %s112, %s114
      %p121 = scmp.eq.s32.totalorder %s22, 1
      %p122 = por %p120, %p121
      %p123 = scmp.ne.s32.totalorder %s114, %s115
      %p124 = scmp.eq.s32.totalorder %s22, 0
      %p125 = por %p123, %p124
      %p126 = scmp.ne.s32.totalorder %s114, %s115
      %p127 = scmp.eq.s32.totalorder %s23, 1
      %p128 = por %p126, %p127
      %p130 = scmp.ne.s32.totalorder %s115, %s129
      %p131 = scmp.eq.s32.totalorder %s23, 0
      %p132 = por %p130, %p131
      %s133 = ssub.s32 %s24, %s36
      %p134 = scmp.eq.s32.totalorder %s133, 0
      %s136 = sadd.s32 %s135, 1
      %s137 = scalar_select %p134, %s135, %s136
      %p140 = pneg %p134
      %p141 = scmp.eq.s32.totalorder %s17, 1
      %p142 = por %p140, %p141
      %p143 = scmp.ne.s32.totalorder %s135, %s138
      %p144 = scmp.eq.s32.totalorder %s17, 0
      %p145 = por %p143, %p144
      %p146 = scmp.ne.s32.totalorder %s135, %s138
      %p147 = scmp.eq.s32.totalorder %s22, 1
      %p148 = por %p146, %p147
      %p149 = scmp.ne.s32.totalorder %s138, %s139
      %p150 = scmp.eq.s32.totalorder %s22, 0
      %p151 = por %p149, %p150
      %p152 = scmp.ne.s32.totalorder %s138, %s139
      %p153 = scmp.eq.s32.totalorder %s23, 1
      %p154 = por %p152, %p153
      %p156 = scmp.ne.s32.totalorder %s139, %s155
      %p157 = scmp.eq.s32.totalorder %s23, 0
      %p158 = por %p156, %p157
      %p159 = scmp.le.s32.totalorder 1, %s17
      %p160 = scmp.lt.s32.totalorder %s17, 3
      %p161 = pnand %p159, %p160
      %p162 = pneg %p161
      // Predicated region
      $region9: #{tpu_custom_call.1} parent=5 // pred_check
        _
      $region10: #{tpu_custom_call.1} parent=5 // pred_check_branch
        %164 = sbr.rel (%p161) target = $region12
      $region11: #{tpu_custom_call.1} parent=5 // pred_region
        %s165 = ssub.s32 %s17, 1
        // Predicated region
        $region13: #{tpu_custom_call.1} parent=11 // pred_check
          %p166 = pneg %p83
        $region14: #{tpu_custom_call.1} parent=11 // pred_check_branch
          %168 = sbr.rel (%p166) target = $region16
        $region15: #{tpu_custom_call.1} parent=11 // pred_region
          %s169 = smul.u32 32, %s27
          %s171 = ssub.s32 2048, 2048
          %172 = vsyncadd [#allocation7], %s171
          %s173 = smul.addr %s169, 64
          %s174 = scalar_lea.hbm %s1, %s173
          %s175 = sshll.u32 [#allocation6], 4
          %s176 = int_to_ptr.vmem [resolvable:$true] %s175
          %181 = dma.hbm_to_vmem [thread:$0]  %s174, 2048, %s176, [#allocation7], 64, 64, 4
        $region16: #{tpu_custom_call.1} parent=11 // pred_fallthru
          _
        // Predicated region
        $region17: #{tpu_custom_call.1} parent=11 // pred_check
          %p182 = pneg %p104
        $region18: #{tpu_custom_call.1} parent=11 // pred_check_branch
          %184 = sbr.rel (%p182) target = $region20
        $region19: #{tpu_custom_call.1} parent=11 // pred_region
          %s186 = ssub.s32 1024, 1024
          %187 = vsyncadd [#allocation7], %s186
          %s188 = sshll.u32 [#allocation8], 4
          %s189 = int_to_ptr.vmem [resolvable:$true] %s188
          %194 = dma.hbm_to_vmem [thread:$0]  %s2, 1024, %s189, [#allocation7], 64, 64, 4
        $region20: #{tpu_custom_call.1} parent=11 // pred_fallthru
          _
        // Predicated region
        $region21: #{tpu_custom_call.1} parent=11 // pred_check
          %p195 = pneg %p125
        $region22: #{tpu_custom_call.1} parent=11 // pred_check_branch
          %197 = sbr.rel (%p195) target = $region24
        $region23: #{tpu_custom_call.1} parent=11 // pred_region
          _
        $region24: #{tpu_custom_call.1} parent=11 // pred_fallthru
          _
      $region12: #{tpu_custom_call.1} parent=5 // pred_fallthru
        _
      %p198 = scmp.lt.s32.totalorder %s17, 2
      // Predicated region
      $region25: #{tpu_custom_call.1} parent=5 // pred_check
        %p199 = pneg %p198
      $region26: #{tpu_custom_call.1} parent=5 // pred_check_branch
        %201 = sbr.rel (%p199) target = $region28
      $region27: #{tpu_custom_call.1} parent=5 // pred_region
        // Predicated region
        $region29: #{tpu_custom_call.1} parent=27 // pred_check
          %p202 = pneg %p51
        $region30: #{tpu_custom_call.1} parent=27 // pred_check_branch
          %204 = sbr.rel (%p202) target = $region32
        $region31: #{tpu_custom_call.1} parent=27 // pred_region
          %s205 = sand.u32 %s41, 1
          %s206 = scalar_lea.sflag [#allocation4], %s205
          %s207 = sand.u32 %s41, 1
          %s208 = smul.addr %s207, 128
          %s209 = scalar_lea.vmem [#allocation3], %s208
          %s210 = smul.u32 16, %s24
          %s211 = smul.u32 2, %s25
          %s213 = ssub.s32 2048, 2048
          %214 = vsyncadd %s206, %s213
          %s215 = smul.addr %s210, 2
          %s216 = sadd.s32 %s211, %s215
          %s217 = smul.addr %s216, 64
          %s218 = scalar_lea.hbm %s0, %s217
          %s219 = sshll.u32 %s209, 4
          %s220 = int_to_ptr.vmem [resolvable:$true] %s219
          %225 = dma.hbm_to_vmem [thread:$0]  %s218, 2048, %s220, %s206, 128, 128, 8
        $region32: #{tpu_custom_call.1} parent=27 // pred_fallthru
          _
      $region28: #{tpu_custom_call.1} parent=5 // pred_fallthru
        _
      %p226 = scmp.le.s32.totalorder 1, %s17
      %p227 = scmp.lt.s32.totalorder %s17, 3
      %p228 = pnand %p226, %p227
      %p229 = pneg %p228
      // Predicated region
      $region33: #{tpu_custom_call.1} parent=5 // pred_check
        _
      $region34: #{tpu_custom_call.1} parent=5 // pred_check_branch
        %231 = sbr.rel (%p228) target = $region36
      $region35: #{tpu_custom_call.1} parent=5 // pred_region
        %s232 = ssub.s32 %s17, 1
        %s233 = sand.u32 %s44, 1
        %s234 = scalar_lea.sflag [#allocation4], %s233
        %s235 = sand.u32 %s44, 1
        %s236 = smul.addr %s235, 128
        %s237 = scalar_lea.vmem [#allocation3], %s236
        // Predicated region
        $region37: #{tpu_custom_call.1} parent=35 // pred_check
          %p238 = pneg %p57
        $region38: #{tpu_custom_call.1} parent=35 // pred_check_branch
          %240 = sbr.rel (%p238) target = $region40
        $region39: #{tpu_custom_call.1} parent=35 // pred_region
          %241 = dma.done %s234, 2048
        $region40: #{tpu_custom_call.1} parent=35 // pred_fallthru
          _
        // Predicated region
        $region41: #{tpu_custom_call.1} parent=35 // pred_check
          %p242 = pneg %p83
        $region42: #{tpu_custom_call.1} parent=35 // pred_check_branch
          %244 = sbr.rel (%p242) target = $region44
        $region43: #{tpu_custom_call.1} parent=35 // pred_region
          %245 = dma.done [#allocation7], 2048
        $region44: #{tpu_custom_call.1} parent=35 // pred_fallthru
          _
        // Predicated region
        $region45: #{tpu_custom_call.1} parent=35 // pred_check
          %p246 = pneg %p104
        $region46: #{tpu_custom_call.1} parent=35 // pred_check_branch
          %248 = sbr.rel (%p246) target = $region48
        $region47: #{tpu_custom_call.1} parent=35 // pred_region
          %249 = dma.done [#allocation7], 1024
        $region48: #{tpu_custom_call.1} parent=35 // pred_fallthru
          _
        %s250 = sand.u32 %s44, 1
        %s251 = scalar_lea.sflag [#allocation4], %s250
        %s252 = sand.u32 %s44, 1
        %s253 = smul.addr %s252, 128
        %s254 = scalar_lea.vmem [#allocation3], %s253
        %p255 = pneg %p57
        %p256 = pneg %p54
        %p257 = pneg %p83
        %p258 = pneg %p80
        %p259 = pneg %p104
        %p260 = pneg %p101
        %p261 = pneg %p125
        %p262 = pneg %p122
        %p263 = pneg %p151
        %p264 = pneg %p148
        %s265 = sand.u32 %s138, 1
        %s266 = scalar_lea.sflag [#allocation5], %s265
        %s267 = sand.u32 %s138, 1
        %s268 = smul.addr %s267, 64
        %s269 = scalar_lea.vmem [#allocation9], %s268
        %s270 = smul.u32 16, %s26
        %s271 = smul.u32 2, %s27
        %s272 = smul.u32 32, %s27
        %s273 = smul.u32 16, %s26
        %p275 = scmp.eq.s32.totalorder %s27, 0
        // Predicated region
        $region49: #{tpu_custom_call.1} parent=35 // pred_check
          %p276 = pneg %p275
        $region50: #{tpu_custom_call.1} parent=35 // pred_check_branch
          %278 = sbr.rel (%p276) target = $region52
        $region51: #{tpu_custom_call.1} parent=35 // pred_region
          %279 = vst [vmem:[#allocation2] sm:$0xff] 0.0
          %280 = vst [vmem:[#allocation2 + $0x8] sm:$0xff] 0.0
          %281 = vst [vmem:[#allocation2 + $0x10] sm:$0xff] 0.0
          %282 = vst [vmem:[#allocation2 + $0x18] sm:$0xff] 0.0
          %283 = vst [vmem:[#allocation2 + $0x20] sm:$0xff] 0.0
          %284 = vst [vmem:[#allocation2 + $0x28] sm:$0xff] 0.0
          %285 = vst [vmem:[#allocation2 + $0x30] sm:$0xff] 0.0
          %286 = vst [vmem:[#allocation2 + $0x38] sm:$0xff] 0.0
          %287 = vst [vmem:[#allocation2 + $0x40] sm:$0xff] 0.0
          %288 = vst [vmem:[#allocation2 + $0x48] sm:$0xff] 0.0
          %289 = vst [vmem:[#allocation2 + $0x50] sm:$0xff] 0.0
          %290 = vst [vmem:[#allocation2 + $0x58] sm:$0xff] 0.0
          %291 = vst [vmem:[#allocation2 + $0x60] sm:$0xff] 0.0
          %292 = vst [vmem:[#allocation2 + $0x68] sm:$0xff] 0.0
          %293 = vst [vmem:[#allocation2 + $0x70] sm:$0xff] 0.0
          %294 = vst [vmem:[#allocation2 + $0x78] sm:$0xff] 0.0
        $region52: #{tpu_custom_call.1} parent=35 // pred_fallthru
          _
        %v295 = vld [vmem:[#allocation2] sm:$0xff]
        %v296 = vld [vmem:[#allocation2 + $0x8] sm:$0xff]
        %v297 = vld [vmem:[#allocation2 + $0x10] sm:$0xff]
        %v298 = vld [vmem:[#allocation2 + $0x18] sm:$0xff]
        %v299 = vld [vmem:[#allocation2 + $0x20] sm:$0xff]
        %v300 = vld [vmem:[#allocation2 + $0x28] sm:$0xff]
        %v301 = vld [vmem:[#allocation2 + $0x30] sm:$0xff]
        %v302 = vld [vmem:[#allocation2 + $0x38] sm:$0xff]
        %v303 = vld [vmem:[#allocation2 + $0x40] sm:$0xff]
        %v304 = vld [vmem:[#allocation2 + $0x48] sm:$0xff]
        %v305 = vld [vmem:[#allocation2 + $0x50] sm:$0xff]
        %v306 = vld [vmem:[#allocation2 + $0x58] sm:$0xff]
        %v307 = vld [vmem:[#allocation2 + $0x60] sm:$0xff]
        %v308 = vld [vmem:[#allocation2 + $0x68] sm:$0xff]
        %v309 = vld [vmem:[#allocation2 + $0x70] sm:$0xff]
        %v310 = vld [vmem:[#allocation2 + $0x78] sm:$0xff]
        %v311 = vld [vmem:[%s237] sm:$0xff]
        %v312 = vld [vmem:[%s237 + $0x8] sm:$0xff]
        %v313 = vld [vmem:[%s237 + $0x10] sm:$0xff]
        %v314 = vld [vmem:[%s237 + $0x18] sm:$0xff]
        %v315 = vld [vmem:[%s237 + $0x20] sm:$0xff]
        %v316 = vld [vmem:[%s237 + $0x28] sm:$0xff]
        %v317 = vld [vmem:[%s237 + $0x30] sm:$0xff]
        %v318 = vld [vmem:[%s237 + $0x38] sm:$0xff]
        %v319 = vld [vmem:[%s237 + $0x40] sm:$0xff]
        %v320 = vld [vmem:[%s237 + $0x48] sm:$0xff]
        %v321 = vld [vmem:[%s237 + $0x50] sm:$0xff]
        %v322 = vld [vmem:[%s237 + $0x58] sm:$0xff]
        %v323 = vld [vmem:[%s237 + $0x60] sm:$0xff]
        %v324 = vld [vmem:[%s237 + $0x68] sm:$0xff]
        %v325 = vld [vmem:[%s237 + $0x70] sm:$0xff]
        %v326 = vld [vmem:[%s237 + $0x78] sm:$0xff]
        %v327 = vld [vmem:[#allocation6] sm:$0xf]
        %v328 = vld [vmem:[#allocation6 + $0x4] sm:$0xf]
        %v329 = vld [vmem:[#allocation6 + $0x8] sm:$0xf]
        %v330 = vld [vmem:[#allocation6 + $0xc] sm:$0xf]
        %v331 = vld [vmem:[#allocation6 + $0x10] sm:$0xf]
        %v332 = vld [vmem:[#allocation6 + $0x14] sm:$0xf]
        %v333 = vld [vmem:[#allocation6 + $0x18] sm:$0xf]
        %v334 = vld [vmem:[#allocation6 + $0x1c] sm:$0xf]
        %v335 = vld [vmem:[#allocation6 + $0x20] sm:$0xf]
        %v336 = vld [vmem:[#allocation6 + $0x24] sm:$0xf]
        %v337 = vld [vmem:[#allocation6 + $0x28] sm:$0xf]
        %v338 = vld [vmem:[#allocation6 + $0x2c] sm:$0xf]
        %v339 = vld [vmem:[#allocation6 + $0x30] sm:$0xf]
        %v340 = vld [vmem:[#allocation6 + $0x34] sm:$0xf]
        %v341 = vld [vmem:[#allocation6 + $0x38] sm:$0xf]
        %v342 = vld [vmem:[#allocation6 + $0x3c] sm:$0xf]
        %v343 = vld [vmem:[#allocation6 + $0x40] sm:$0xf]
        %v344 = vld [vmem:[#allocation6 + $0x44] sm:$0xf]
        %v345 = vld [vmem:[#allocation6 + $0x48] sm:$0xf]
        %v346 = vld [vmem:[#allocation6 + $0x4c] sm:$0xf]
        %v347 = vld [vmem:[#allocation6 + $0x50] sm:$0xf]
        %v348 = vld [vmem:[#allocation6 + $0x54] sm:$0xf]
        %v349 = vld [vmem:[#allocation6 + $0x58] sm:$0xf]
        %v350 = vld [vmem:[#allocation6 + $0x5c] sm:$0xf]
        %v351 = vld [vmem:[#allocation6 + $0x60] sm:$0xf]
        %v352 = vld [vmem:[#allocation6 + $0x64] sm:$0xf]
        %v353 = vld [vmem:[#allocation6 + $0x68] sm:$0xf]
        %v354 = vld [vmem:[#allocation6 + $0x6c] sm:$0xf]
        %v355 = vld [vmem:[#allocation6 + $0x70] sm:$0xf]
        %v356 = vld [vmem:[#allocation6 + $0x74] sm:$0xf]
        %v357 = vld [vmem:[#allocation6 + $0x78] sm:$0xf]
        %v358 = vld [vmem:[#allocation6 + $0x7c] sm:$0xf]
        %v375 = vunpack.c.l.b16 %v311
        %v376 = vunpack.c.h.b16 %v311
        %v377 = vunpack.c.l.b16 %v312
        %v378 = vunpack.c.h.b16 %v312
        %v379 = vunpack.c.l.b16 %v313
        %v380 = vunpack.c.h.b16 %v313
        %v381 = vunpack.c.l.b16 %v314
        %v382 = vunpack.c.h.b16 %v314
        %v383 = vunpack.c.l.b16 %v315
        %v384 = vunpack.c.h.b16 %v315
        %v385 = vunpack.c.l.b16 %v316
        %v386 = vunpack.c.h.b16 %v316
        %v387 = vunpack.c.l.b16 %v317
        %v388 = vunpack.c.h.b16 %v317
        %v389 = vunpack.c.l.b16 %v318
        %v390 = vunpack.c.h.b16 %v318
        %v391 = vunpack.c.l.b16 %v319
        %v392 = vunpack.c.h.b16 %v319
        %v393 = vunpack.c.l.b16 %v320
        %v394 = vunpack.c.h.b16 %v320
        %v395 = vunpack.c.l.b16 %v321
        %v396 = vunpack.c.h.b16 %v321
        %v397 = vunpack.c.l.b16 %v322
        %v398 = vunpack.c.h.b16 %v322
        %v399 = vunpack.c.l.b16 %v323
        %v400 = vunpack.c.h.b16 %v323
        %v401 = vunpack.c.l.b16 %v324
        %v402 = vunpack.c.h.b16 %v324
        %v403 = vunpack.c.l.b16 %v325
        %v404 = vunpack.c.h.b16 %v325
        %v405 = vunpack.c.l.b16 %v326
        %v406 = vunpack.c.h.b16 %v326
        %v407 = vpack.c.b16 %v377, %v375
        %v408 = vpack.c.b16 %v378, %v376
        %v409 = vpack.c.b16 %v381, %v379
        %v410 = vpack.c.b16 %v382, %v380
        %v411 = vpack.c.b16 %v385, %v383
        %v412 = vpack.c.b16 %v386, %v384
        %v413 = vpack.c.b16 %v389, %v387
        %v414 = vpack.c.b16 %v390, %v388
        %v415 = vpack.c.b16 %v393, %v391
        %v416 = vpack.c.b16 %v394, %v392
        %v417 = vpack.c.b16 %v397, %v395
        %v418 = vpack.c.b16 %v398, %v396
        %v419 = vpack.c.b16 %v401, %v399
        %v420 = vpack.c.b16 %v402, %v400
        %v421 = vpack.c.b16 %v405, %v403
        %v422 = vpack.c.b16 %v406, %v404
        %v471 = vunpack.c.l.b16 %v327
        %v472 = vunpack.c.l.b16 %v328
        %v473 = vunpack.c.l.b16 %v329
        %v474 = vunpack.c.l.b16 %v330
        %v475 = vunpack.c.l.b16 %v331
        %v476 = vunpack.c.l.b16 %v332
        %v477 = vunpack.c.l.b16 %v333
        %v478 = vunpack.c.l.b16 %v334
        %v479 = vunpack.c.l.b16 %v335
        %v480 = vunpack.c.l.b16 %v336
        %v481 = vunpack.c.l.b16 %v337
        %v482 = vunpack.c.l.b16 %v338
        %v483 = vunpack.c.l.b16 %v339
        %v484 = vunpack.c.l.b16 %v340
        %v485 = vunpack.c.l.b16 %v341
        %v486 = vunpack.c.l.b16 %v342
        %v487 = vunpack.c.l.b16 %v343
        %v488 = vunpack.c.l.b16 %v344
        %v489 = vunpack.c.l.b16 %v345
        %v490 = vunpack.c.l.b16 %v346
        %v491 = vunpack.c.l.b16 %v347
        %v492 = vunpack.c.l.b16 %v348
        %v493 = vunpack.c.l.b16 %v349
        %v494 = vunpack.c.l.b16 %v350
        %v495 = vunpack.c.l.b16 %v351
        %v496 = vunpack.c.l.b16 %v352
        %v497 = vunpack.c.l.b16 %v353
        %v498 = vunpack.c.l.b16 %v354
        %v499 = vunpack.c.l.b16 %v355
        %v500 = vunpack.c.l.b16 %v356
        %v501 = vunpack.c.l.b16 %v357
        %v502 = vunpack.c.l.b16 %v358
        %v503 = vpack.c.b16 %v472, %v471
        %v504 = vpack.c.b16 %v474, %v473
        %v505 = vpack.c.b16 %v476, %v475
        %v506 = vpack.c.b16 %v478, %v477
        %v507 = vpack.c.b16 %v480, %v479
        %v508 = vpack.c.b16 %v482, %v481
        %v509 = vpack.c.b16 %v484, %v483
        %v510 = vpack.c.b16 %v486, %v485
        %v511 = vpack.c.b16 %v488, %v487
        %v512 = vpack.c.b16 %v490, %v489
        %v513 = vpack.c.b16 %v492, %v491
        %v514 = vpack.c.b16 %v494, %v493
        %v515 = vpack.c.b16 %v496, %v495
        %v516 = vpack.c.b16 %v498, %v497
        %v517 = vpack.c.b16 %v500, %v499
        %v518 = vpack.c.b16 %v502, %v501
        %535 = vmatprep.subr.bf16.mxu0 0
        %536 = vmatpush1.bf16.msra.mxu0 %v503
        %537 = vmatprep.subr.bf16.mxu0 0
        %538 = vmatpush1.bf16.msra.mxu0 %v504
        %539 = vmatprep.subr.bf16.mxu0 0
        %540 = vmatpush1.bf16.msra.mxu0 %v505
        %541 = vmatprep.subr.bf16.mxu0 0
        %542 = vmatpush1.bf16.msra.mxu0 %v506
        %543 = vmatprep.subr.bf16.mxu0 0
        %544 = vmatpush1.bf16.msra.mxu0 %v507
        %545 = vmatprep.subr.bf16.mxu0 0
        %546 = vmatpush1.bf16.msra.mxu0 %v508
        %547 = vmatprep.subr.bf16.mxu0 0
        %548 = vmatpush1.bf16.msra.mxu0 %v509
        %549 = vmatprep.subr.bf16.mxu0 0
        %550 = vmatpush1.bf16.msra.mxu0 %v510
        %551 = vmatprep.subr.bf16.mxu0 0
        %552 = vmatpush1.bf16.msra.mxu0 %v511
        %553 = vmatprep.subr.bf16.mxu0 0
        %554 = vmatpush1.bf16.msra.mxu0 %v512
        %555 = vmatprep.subr.bf16.mxu0 0
        %556 = vmatpush1.bf16.msra.mxu0 %v513
        %557 = vmatprep.subr.bf16.mxu0 0
        %558 = vmatpush1.bf16.msra.mxu0 %v514
        %559 = vmatprep.subr.bf16.mxu0 0
        %560 = vmatpush1.bf16.msra.mxu0 %v515
        %561 = vmatprep.subr.bf16.mxu0 0
        %562 = vmatpush1.bf16.msra.mxu0 %v516
        %563 = vmatprep.subr.bf16.mxu0 0
        %564 = vmatpush1.bf16.msra.mxu0 %v517
        %565 = vmatprep.subr.bf16.mxu0 0
        %566 = vmatpush1.bf16.msra.mxu0 %v518
        %567 = vmatprep.mubr.bf16.mxu0 %v408
        %568 = vmatmul.mubr.bf16.gmra.mrb[0].mxu0 %v407
        %v569 = vpop.f32.mrb[0].mxu0
        %v570 = vadd.f32 0.0, %v569
        %v571 = vpop.f32.mrb[0].mxu0
        %v572 = vpop.f32.mrb[0].mxu0
        %v573 = vadd.f32 0.0, %v572
        %v574 = vpop.f32.mrb[0].mxu0
        %575 = vmatprep.mubr.bf16.mxu0 %v410
        %576 = vmatmul.mubr.bf16.gmra.mrb[0].mxu0 %v409
        %v577 = vpop.f32.mrb[0].mxu0
        %v578 = vadd.f32 0.0, %v577
        %v579 = vpop.f32.mrb[0].mxu0
        %v580 = vpop.f32.mrb[0].mxu0
        %v581 = vadd.f32 0.0, %v580
        %v582 = vpop.f32.mrb[0].mxu0
        %583 = vmatprep.mubr.bf16.mxu0 %v412
        %584 = vmatmul.mubr.bf16.gmra.mrb[0].mxu0 %v411
        %v585 = vpop.f32.mrb[0].mxu0
        %v586 = vadd.f32 0.0, %v585
        %v587 = vpop.f32.mrb[0].mxu0
        %v588 = vpop.f32.mrb[0].mxu0
        %v589 = vadd.f32 0.0, %v588
        %v590 = vpop.f32.mrb[0].mxu0
        %591 = vmatprep.mubr.bf16.mxu0 %v414
        %592 = vmatmul.mubr.bf16.gmra.mrb[0].mxu0 %v413
        %v593 = vpop.f32.mrb[0].mxu0
        %v594 = vadd.f32 0.0, %v593
        %v595 = vpop.f32.mrb[0].mxu0
        %v596 = vpop.f32.mrb[0].mxu0
        %v597 = vadd.f32 0.0, %v596
        %v598 = vpop.f32.mrb[0].mxu0
        %599 = vmatprep.mubr.bf16.mxu0 %v416
        %600 = vmatmul.mubr.bf16.gmra.mrb[0].mxu0 %v415
        %v601 = vpop.f32.mrb[0].mxu0
        %v602 = vadd.f32 0.0, %v601
        %v603 = vpop.f32.mrb[0].mxu0
        %v604 = vpop.f32.mrb[0].mxu0
        %v605 = vadd.f32 0.0, %v604
        %v606 = vpop.f32.mrb[0].mxu0
        %607 = vmatprep.mubr.bf16.mxu0 %v418
        %608 = vmatmul.mubr.bf16.gmra.mrb[0].mxu0 %v417
        %v609 = vpop.f32.mrb[0].mxu0
        %v610 = vadd.f32 0.0, %v609
        %v611 = vpop.f32.mrb[0].mxu0
        %v612 = vpop.f32.mrb[0].mxu0
        %v613 = vadd.f32 0.0, %v612
        %v614 = vpop.f32.mrb[0].mxu0
        %615 = vmatprep.mubr.bf16.mxu0 %v420
        %616 = vmatmul.mubr.bf16.gmra.mrb[0].mxu0 %v419
        %v617 = vpop.f32.mrb[0].mxu0
        %v618 = vadd.f32 0.0, %v617
        %v619 = vpop.f32.mrb[0].mxu0
        %v620 = vpop.f32.mrb[0].mxu0
        %v621 = vadd.f32 0.0, %v620
        %v622 = vpop.f32.mrb[0].mxu0
        %623 = vmatprep.mubr.bf16.mxu0 %v422
        %624 = vmatmul.mubr.bf16.gmra.mrb[0].mxu0 %v421
        %v625 = vpop.f32.mrb[0].mxu0
        %v626 = vadd.f32 0.0, %v625
        %v627 = vpop.f32.mrb[0].mxu0
        %v628 = vpop.f32.mrb[0].mxu0
        %v629 = vadd.f32 0.0, %v628
        %v630 = vpop.f32.mrb[0].mxu0
        %631 = vdwg.mxu0
        %v632 = vadd.f32 %v295, %v570
        %v633 = vadd.f32 %v296, %v573
        %v634 = vadd.f32 %v297, %v578
        %v635 = vadd.f32 %v298, %v581
        %v636 = vadd.f32 %v299, %v586
        %v637 = vadd.f32 %v300, %v589
        %v638 = vadd.f32 %v301, %v594
        %v639 = vadd.f32 %v302, %v597
        %v640 = vadd.f32 %v303, %v602
        %v641 = vadd.f32 %v304, %v605
        %v642 = vadd.f32 %v305, %v610
        %v643 = vadd.f32 %v306, %v613
        %v644 = vadd.f32 %v307, %v618
        %v645 = vadd.f32 %v308, %v621
        %v646 = vadd.f32 %v309, %v626
        %v647 = vadd.f32 %v310, %v629
        %648 = vst [vmem:[#allocation2] sm:$0xff] %v632
        %649 = vst [vmem:[#allocation2 + $0x8] sm:$0xff] %v633
        %650 = vst [vmem:[#allocation2 + $0x10] sm:$0xff] %v634
        %651 = vst [vmem:[#allocation2 + $0x18] sm:$0xff] %v635
        %652 = vst [vmem:[#allocation2 + $0x20] sm:$0xff] %v636
        %653 = vst [vmem:[#allocation2 + $0x28] sm:$0xff] %v637
        %654 = vst [vmem:[#allocation2 + $0x30] sm:$0xff] %v638
        %655 = vst [vmem:[#allocation2 + $0x38] sm:$0xff] %v639
        %656 = vst [vmem:[#allocation2 + $0x40] sm:$0xff] %v640
        %657 = vst [vmem:[#allocation2 + $0x48] sm:$0xff] %v641
        %658 = vst [vmem:[#allocation2 + $0x50] sm:$0xff] %v642
        %659 = vst [vmem:[#allocation2 + $0x58] sm:$0xff] %v643
        %660 = vst [vmem:[#allocation2 + $0x60] sm:$0xff] %v644
        %661 = vst [vmem:[#allocation2 + $0x68] sm:$0xff] %v645
        %662 = vst [vmem:[#allocation2 + $0x70] sm:$0xff] %v646
        %663 = vst [vmem:[#allocation2 + $0x78] sm:$0xff] %v647
        // Predicated region
        $region53: #{tpu_custom_call.1} parent=35 // pred_check
          %p664 = pneg %p275
        $region54: #{tpu_custom_call.1} parent=35 // pred_check_branch
          %666 = sbr.rel (%p664) target = $region56
        $region55: #{tpu_custom_call.1} parent=35 // pred_region
          %v667 = vld [vmem:[#allocation2] sm:$0xff]
          %v668 = vld [vmem:[#allocation2 + $0x8] sm:$0xff]
          %v669 = vld [vmem:[#allocation2 + $0x10] sm:$0xff]
          %v670 = vld [vmem:[#allocation2 + $0x18] sm:$0xff]
          %v671 = vld [vmem:[#allocation2 + $0x20] sm:$0xff]
          %v672 = vld [vmem:[#allocation2 + $0x28] sm:$0xff]
          %v673 = vld [vmem:[#allocation2 + $0x30] sm:$0xff]
          %v674 = vld [vmem:[#allocation2 + $0x38] sm:$0xff]
          %v675 = vld [vmem:[#allocation2 + $0x40] sm:$0xff]
          %v676 = vld [vmem:[#allocation2 + $0x48] sm:$0xff]
          %v677 = vld [vmem:[#allocation2 + $0x50] sm:$0xff]
          %v678 = vld [vmem:[#allocation2 + $0x58] sm:$0xff]
          %v679 = vld [vmem:[#allocation2 + $0x60] sm:$0xff]
          %v680 = vld [vmem:[#allocation2 + $0x68] sm:$0xff]
          %v681 = vld [vmem:[#allocation2 + $0x70] sm:$0xff]
          %v682 = vld [vmem:[#allocation2 + $0x78] sm:$0xff]
          %v683 = vpack.c.bf16 %v668, %v667
          %v684 = vpack.c.bf16 %v670, %v669
          %v685 = vpack.c.bf16 %v672, %v671
          %v686 = vpack.c.bf16 %v674, %v673
          %v687 = vpack.c.bf16 %v676, %v675
          %v688 = vpack.c.bf16 %v678, %v677
          %v689 = vpack.c.bf16 %v680, %v679
          %v690 = vpack.c.bf16 %v682, %v681
          %v691 = vld [vmem:[#allocation8] sm:$0xf]
          %v692 = vld [vmem:[#allocation8 + $0x4] sm:$0xf]
          %v693 = vld [vmem:[#allocation8 + $0x8] sm:$0xf]
          %v694 = vld [vmem:[#allocation8 + $0xc] sm:$0xf]
          %v695 = vld [vmem:[#allocation8 + $0x10] sm:$0xf]
          %v696 = vld [vmem:[#allocation8 + $0x14] sm:$0xf]
          %v697 = vld [vmem:[#allocation8 + $0x18] sm:$0xf]
          %v698 = vld [vmem:[#allocation8 + $0x1c] sm:$0xf]
          %v699 = vld [vmem:[#allocation8 + $0x20] sm:$0xf]
          %v700 = vld [vmem:[#allocation8 + $0x24] sm:$0xf]
          %v701 = vld [vmem:[#allocation8 + $0x28] sm:$0xf]
          %v702 = vld [vmem:[#allocation8 + $0x2c] sm:$0xf]
          %v703 = vld [vmem:[#allocation8 + $0x30] sm:$0xf]
          %v704 = vld [vmem:[#allocation8 + $0x34] sm:$0xf]
          %v705 = vld [vmem:[#allocation8 + $0x38] sm:$0xf]
          %v706 = vld [vmem:[#allocation8 + $0x3c] sm:$0xf]
          %v707 = vld [vmem:[%s3] sm:$0x1]
          %v709 = vlaneseq
          %v710 = vshrl.u32 %v709, 7
          %v711 = vsub.s32 0, %v710
          %v712 = vrot.slane %v707, %v711
          %v730 = vunpack.c.l.b16 %v691
          %v731 = vunpack.c.l.b16 %v692
          %v732 = vunpack.c.l.b16 %v693
          %v733 = vunpack.c.l.b16 %v694
          %v734 = vunpack.c.l.b16 %v695
          %v735 = vunpack.c.l.b16 %v696
          %v736 = vunpack.c.l.b16 %v697
          %v737 = vunpack.c.l.b16 %v698
          %v738 = vunpack.c.l.b16 %v699
          %v739 = vunpack.c.l.b16 %v700
          %v740 = vunpack.c.l.b16 %v701
          %v741 = vunpack.c.l.b16 %v702
          %v742 = vunpack.c.l.b16 %v703
          %v743 = vunpack.c.l.b16 %v704
          %v744 = vunpack.c.l.b16 %v705
          %v745 = vunpack.c.l.b16 %v706
          %v746 = vpack.c.b16 %v731, %v730
          %v747 = vpack.c.b16 %v733, %v732
          %v748 = vpack.c.b16 %v735, %v734
          %v749 = vpack.c.b16 %v737, %v736
          %v750 = vpack.c.b16 %v739, %v738
          %v751 = vpack.c.b16 %v741, %v740
          %v752 = vpack.c.b16 %v743, %v742
          %v753 = vpack.c.b16 %v745, %v744
          %762 = vmatprep.subr.bf16.mxu0 0
          %763 = vmatpush1.bf16.msra.mxu0 %v746
          %764 = vmatprep.subr.bf16.mxu0 0
          %765 = vmatpush1.bf16.msra.mxu0 %v747
          %766 = vmatprep.subr.bf16.mxu0 0
          %767 = vmatpush1.bf16.msra.mxu0 %v748
          %768 = vmatprep.subr.bf16.mxu0 0
          %769 = vmatpush1.bf16.msra.mxu0 %v749
          %770 = vmatprep.subr.bf16.mxu0 0
          %771 = vmatpush1.bf16.msra.mxu0 %v750
          %772 = vmatprep.subr.bf16.mxu0 0
          %773 = vmatpush1.bf16.msra.mxu0 %v751
          %774 = vmatprep.subr.bf16.mxu0 0
          %775 = vmatpush1.bf16.msra.mxu0 %v752
          %776 = vmatprep.subr.bf16.mxu0 0
          %777 = vmatpush1.bf16.msra.mxu0 %v753
          %778 = vmatprep.subr.bf16.mxu0 0
          %779 = vmatpush1.bf16.msra.mxu0 0
          %780 = vmatprep.subr.bf16.mxu0 0
          %781 = vmatpush1.bf16.msra.mxu0 0
          %782 = vmatprep.subr.bf16.mxu0 0
          %783 = vmatpush1.bf16.msra.mxu0 0
          %784 = vmatprep.subr.bf16.mxu0 0
          %785 = vmatpush1.bf16.msra.mxu0 0
          %786 = vmatprep.subr.bf16.mxu0 0
          %787 = vmatpush1.bf16.msra.mxu0 0
          %788 = vmatprep.subr.bf16.mxu0 0
          %789 = vmatpush1.bf16.msra.mxu0 0
          %790 = vmatprep.subr.bf16.mxu0 0
          %791 = vmatpush1.bf16.msra.mxu0 0
          %792 = vmatprep.subr.bf16.mxu0 0
          %793 = vmatpush1.bf16.msra.mxu0 0
          %794 = vmatprep.mubr.bf16.mxu0 0
          %795 = vmatmul.mubr.bf16.gmra.mrb[0].mxu0 %v683
          %v796 = vpop.f32.mrb[0].mxu0
          %v797 = vadd.f32 %v712, %v796
          %v798 = vpop.f32.mrb[0].mxu0
          %v799 = vpop.f32.mrb[0].mxu0
          %v800 = vadd.f32 %v712, %v799
          %v801 = vpop.f32.mrb[0].mxu0
          %802 = vmatprep.mubr.bf16.mxu0 0
          %803 = vmatmul.mubr.bf16.gmra.mrb[0].mxu0 %v684
          %v804 = vpop.f32.mrb[0].mxu0
          %v805 = vadd.f32 %v712, %v804
          %v806 = vpop.f32.mrb[0].mxu0
          %v807 = vpop.f32.mrb[0].mxu0
          %v808 = vadd.f32 %v712, %v807
          %v809 = vpop.f32.mrb[0].mxu0
          %810 = vmatprep.mubr.bf16.mxu0 0
          %811 = vmatmul.mubr.bf16.gmra.mrb[0].mxu0 %v685
          %v812 = vpop.f32.mrb[0].mxu0
          %v813 = vadd.f32 %v712, %v812
          %v814 = vpop.f32.mrb[0].mxu0
          %v815 = vpop.f32.mrb[0].mxu0
          %v816 = vadd.f32 %v712, %v815
          %v817 = vpop.f32.mrb[0].mxu0
          %818 = vmatprep.mubr.bf16.mxu0 0
          %819 = vmatmul.mubr.bf16.gmra.mrb[0].mxu0 %v686
          %v820 = vpop.f32.mrb[0].mxu0
          %v821 = vadd.f32 %v712, %v820
          %v822 = vpop.f32.mrb[0].mxu0
          %v823 = vpop.f32.mrb[0].mxu0
          %v824 = vadd.f32 %v712, %v823
          %v825 = vpop.f32.mrb[0].mxu0
          %826 = vmatprep.mubr.bf16.mxu0 0
          %827 = vmatmul.mubr.bf16.gmra.mrb[0].mxu0 %v687
          %v828 = vpop.f32.mrb[0].mxu0
          %v829 = vadd.f32 %v712, %v828
          %v830 = vpop.f32.mrb[0].mxu0
          %v831 = vpop.f32.mrb[0].mxu0
          %v832 = vadd.f32 %v712, %v831
          %v833 = vpop.f32.mrb[0].mxu0
          %834 = vmatprep.mubr.bf16.mxu0 0
          %835 = vmatmul.mubr.bf16.gmra.mrb[0].mxu0 %v688
          %v836 = vpop.f32.mrb[0].mxu0
          %v837 = vadd.f32 %v712, %v836
          %v838 = vpop.f32.mrb[0].mxu0
          %v839 = vpop.f32.mrb[0].mxu0
          %v840 = vadd.f32 %v712, %v839
          %v841 = vpop.f32.mrb[0].mxu0
          %842 = vmatprep.mubr.bf16.mxu0 0
          %843 = vmatmul.mubr.bf16.gmra.mrb[0].mxu0 %v689
          %v844 = vpop.f32.mrb[0].mxu0
          %v845 = vadd.f32 %v712, %v844
          %v846 = vpop.f32.mrb[0].mxu0
          %v847 = vpop.f32.mrb[0].mxu0
          %v848 = vadd.f32 %v712, %v847
          %v849 = vpop.f32.mrb[0].mxu0
          %850 = vmatprep.mubr.bf16.mxu0 0
          %851 = vmatmul.mubr.bf16.gmra.mrb[0].mxu0 %v690
          %v852 = vpop.f32.mrb[0].mxu0
          %v853 = vadd.f32 %v712, %v852
          %v854 = vpop.f32.mrb[0].mxu0
          %v855 = vpop.f32.mrb[0].mxu0
          %v856 = vadd.f32 %v712, %v855
          %v857 = vpop.f32.mrb[0].mxu0
          %858 = vdwg.mxu0
          %v859 = vmax.f32 %v797, 0.0
          %v860 = vmax.f32 %v800, 0.0
          %v861 = vmax.f32 %v805, 0.0
          %v862 = vmax.f32 %v808, 0.0
          %v863 = vmax.f32 %v813, 0.0
          %v864 = vmax.f32 %v816, 0.0
          %v865 = vmax.f32 %v821, 0.0
          %v866 = vmax.f32 %v824, 0.0
          %v867 = vmax.f32 %v829, 0.0
          %v868 = vmax.f32 %v832, 0.0
          %v869 = vmax.f32 %v837, 0.0
          %v870 = vmax.f32 %v840, 0.0
          %v871 = vmax.f32 %v845, 0.0
          %v872 = vmax.f32 %v848, 0.0
          %v873 = vmax.f32 %v853, 0.0
          %v874 = vmax.f32 %v856, 0.0
          %v875 = vpack.c.bf16 %v860, %v859
          %v876 = vpack.c.bf16 %v862, %v861
          %v877 = vpack.c.bf16 %v864, %v863
          %v878 = vpack.c.bf16 %v866, %v865
          %v879 = vpack.c.bf16 %v868, %v867
          %v880 = vpack.c.bf16 %v870, %v869
          %v881 = vpack.c.bf16 %v872, %v871
          %v882 = vpack.c.bf16 %v874, %v873
          %v891 = vunpack.c.l.b16 %v875
          %v892 = vunpack.c.h.b16 %v875
          %v893 = vunpack.c.l.b16 %v876
          %v894 = vunpack.c.h.b16 %v876
          %v895 = vunpack.c.l.b16 %v877
          %v896 = vunpack.c.h.b16 %v877
          %v897 = vunpack.c.l.b16 %v878
          %v898 = vunpack.c.h.b16 %v878
          %v899 = vunpack.c.l.b16 %v879
          %v900 = vunpack.c.h.b16 %v879
          %v901 = vunpack.c.l.b16 %v880
          %v902 = vunpack.c.h.b16 %v880
          %v903 = vunpack.c.l.b16 %v881
          %v904 = vunpack.c.h.b16 %v881
          %v905 = vunpack.c.l.b16 %v882
          %v906 = vunpack.c.h.b16 %v882
          %v907 = vpack.c.b16 %v891, %v891
          %v908 = vpack.c.b16 %v892, %v892
          %v909 = vpack.c.b16 %v893, %v893
          %v910 = vpack.c.b16 %v894, %v894
          %v911 = vpack.c.b16 %v895, %v895
          %v912 = vpack.c.b16 %v896, %v896
          %v913 = vpack.c.b16 %v897, %v897
          %v914 = vpack.c.b16 %v898, %v898
          %v915 = vpack.c.b16 %v899, %v899
          %v916 = vpack.c.b16 %v900, %v900
          %v917 = vpack.c.b16 %v901, %v901
          %v918 = vpack.c.b16 %v902, %v902
          %v919 = vpack.c.b16 %v903, %v903
          %v920 = vpack.c.b16 %v904, %v904
          %v921 = vpack.c.b16 %v905, %v905
          %v922 = vpack.c.b16 %v906, %v906
          %939 = vst [vmem:[%s269] sm:$0xf] %v907
          %940 = vst [vmem:[%s269 + $0x4] sm:$0xf] %v908
          %941 = vst [vmem:[%s269 + $0x8] sm:$0xf] %v909
          %942 = vst [vmem:[%s269 + $0xc] sm:$0xf] %v910
          %943 = vst [vmem:[%s269 + $0x10] sm:$0xf] %v911
          %944 = vst [vmem:[%s269 + $0x14] sm:$0xf] %v912
          %945 = vst [vmem:[%s269 + $0x18] sm:$0xf] %v913
          %946 = vst [vmem:[%s269 + $0x1c] sm:$0xf] %v914
          %947 = vst [vmem:[%s269 + $0x20] sm:$0xf] %v915
          %948 = vst [vmem:[%s269 + $0x24] sm:$0xf] %v916
          %949 = vst [vmem:[%s269 + $0x28] sm:$0xf] %v917
          %950 = vst [vmem:[%s269 + $0x2c] sm:$0xf] %v918
          %951 = vst [vmem:[%s269 + $0x30] sm:$0xf] %v919
          %952 = vst [vmem:[%s269 + $0x34] sm:$0xf] %v920
          %953 = vst [vmem:[%s269 + $0x38] sm:$0xf] %v921
          %954 = vst [vmem:[%s269 + $0x3c] sm:$0xf] %v922
        $region56: #{tpu_custom_call.1} parent=35 // pred_fallthru
          _
        %s955 = sand.u32 %s138, 1
        %s956 = scalar_lea.sflag [#allocation5], %s955
        %s957 = sand.u32 %s138, 1
        %s958 = smul.addr %s957, 64
        %s959 = scalar_lea.vmem [#allocation9], %s958
        // Predicated region
        $region57: #{tpu_custom_call.1} parent=35 // pred_check
          %p960 = pneg %p148
        $region58: #{tpu_custom_call.1} parent=35 // pred_check_branch
          %962 = sbr.rel (%p960) target = $region60
        $region59: #{tpu_custom_call.1} parent=35 // pred_region
          %s963 = smul.u32 16, %s26
          %s965 = ssub.s32 1024, 1024
          %966 = vsyncadd %s956, %s965
          %s967 = smul.addr %s963, 64
          %s968 = scalar_lea.hbm %s4, %s967
          %s969 = sshll.u32 %s959, 4
          %s970 = int_to_ptr.vmem [resolvable:$true] %s969
          %975 = dma.vmem_to_hbm [thread:$0]  %s970, 1024, %s968, %s956, 64, 64, 4
        $region60: #{tpu_custom_call.1} parent=35 // pred_fallthru
          _
      $region36: #{tpu_custom_call.1} parent=5 // pred_fallthru
        _
      %p976 = scmp.le.s32.totalorder 2, %s17
      // Predicated region
      $region61: #{tpu_custom_call.1} parent=5 // pred_check
        %p977 = pneg %p976
      $region62: #{tpu_custom_call.1} parent=5 // pred_check_branch
        %979 = sbr.rel (%p977) target = $region64
      $region63: #{tpu_custom_call.1} parent=5 // pred_region
        %s980 = ssub.s32 %s17, 2
        // Predicated region
        $region65: #{tpu_custom_call.1} parent=63 // pred_check
          %p981 = pneg %p154
        $region66: #{tpu_custom_call.1} parent=63 // pred_check_branch
          %983 = sbr.rel (%p981) target = $region68
        $region67: #{tpu_custom_call.1} parent=63 // pred_region
          %s984 = sand.u32 %s139, 1
          %s985 = scalar_lea.sflag [#allocation5], %s984
          %s986 = sand.u32 %s139, 1
          %s987 = smul.addr %s986, 64
          %s988 = scalar_lea.vmem [#allocation9], %s987
          %989 = dma.done %s985, 1024
        $region68: #{tpu_custom_call.1} parent=63 // pred_fallthru
          _
      $region64: #{tpu_custom_call.1} parent=5 // pred_fallthru
        _
    $region6: #{tpu_custom_call.1} parent=1 // loop_footer
      %s21 = sadd.s32 1, %s17
    $region7: #{tpu_custom_call.1} parent=1 // loop_footer_branch
      %16 = sbr.rel target = $region3
    $region8: #{tpu_custom_call.1} parent=1 // loop_exit
      _
    %990 = vsyncpa [#allocation4], 1
    %s991 = scalar_lea.sflag [#allocation4], 1
    %992 = vsyncpa %s991, 1
    %993 = vsyncpa [#allocation7], 1
    %994 = vsyncpa [#allocation5], 1
    %s995 = scalar_lea.sflag [#allocation5], 1
    %996 = vsyncpa %s995, 1

</llo_original>
